<compile_context>
chip_gen: v7x
topology: tpu7x:2x2x1
jax: 0.10.0
libtpu: 0.0.40
codegen_flags: <defaults>
</compile_context>

<pallas_src>
import functools
import inspect

import jax
import jax.numpy as jnp
from jax.experimental import pallas as pl
from jax.experimental.pallas import tpu as pltpu


# ---------------------------------------------------------------------------
# small helpers
# ---------------------------------------------------------------------------
def _round_up(v, m):
    return -(-v // m) * m


def _cdiv(a, b):
    return -(-a // b)


def _sublane(dtype):
    """Native second-minor tile multiple: f32 -> 8, bf16 -> 16, int8/fp8 -> 32."""
    return {4: 8, 2: 16, 1: 32}.get(jnp.dtype(dtype).itemsize, 8)


def _balanced_tile(dim, cap, align):
    """Largest roughly-balanced tile <= ~cap (aligned) minimizing tail padding."""
    dim_a = _round_up(dim, align)
    if dim_a <= cap:
        return dim_a
    n_tiles = _cdiv(dim_a, cap)
    return _round_up(_cdiv(dim_a, n_tiles), align)


def _vmem_budget():
    """(tile-budget bytes, scoped vmem_limit bytes), per-TensorCore aware."""
    kind = ""
    try:
        kind = jax.devices()[0].device_kind.lower()
    except Exception:
        pass
    cap = None
    try:
        cap = int(pltpu.get_tpu_info().vmem_capacity_bytes)
    except Exception:
        cap = None
    if "v7" in kind:
        clamp = 64 << 20      # v7x: 64 MiB per TensorCore (2 TCs share a chip)
    elif any(t in kind for t in ("v5", "v6")):
        clamp = 128 << 20     # v5e / v6e: 128 MiB per TensorCore
    else:
        clamp = 64 << 20      # unknown chip: be conservative
    cap = clamp if cap is None else min(cap, clamp)
    return int(cap * 0.45), int(cap * 0.70)


def _supports_pipeline_mode():
    try:
        return (hasattr(pl, "Buffered")
                and "pipeline_mode" in inspect.signature(pl.BlockSpec).parameters)
    except (TypeError, ValueError):
        return False


_HAS_PIPELINE_MODE = _supports_pipeline_mode()


def _w_spec(block_shape, index_map, extra_buffering):
    """Weight BlockSpec; triple-buffered when headroom allows (hides the weight
    DMA stream in the mem-bound small-M / decode regime)."""
    if extra_buffering and _HAS_PIPELINE_MODE:
        try:
            return pl.BlockSpec(block_shape, index_map,
                                pipeline_mode=pl.Buffered(3))
        except TypeError:
            pass
    return pl.BlockSpec(block_shape, index_map)


# ---------------------------------------------------------------------------
# tile selection
# ---------------------------------------------------------------------------
def _weight_tiles(K, N, w_dtype, budget):
    """tk/tn depend only on (K, N, dtype) so the weight can be pre-padded once.

    Shrink order keeps the MXU fed: K depth first (floor 512), then N width
    (floor 256), then the 128 floors.
    """
    w_b = jnp.dtype(w_dtype).itemsize
    Ka = _round_up(K, 128)
    Na = _round_up(N, 128)
    # prefer 256-wide N tiles (v6e/v7x MXU is 2x256^2) when it costs no padding
    tn_align = 256 if Na % 256 == 0 else 128
    tn = _balanced_tile(Na, 512, tn_align)
    tk = _balanced_tile(Ka, 2048, 128)

    def w_bytes(tk_, tn_):
        return 2 * tk_ * tn_ * w_b  # double-buffered weight tile

    while w_bytes(tk, tn) > budget // 2 and tk > 512:
        tk = _balanced_tile(Ka, max(512, _round_up(tk // 2, 128)), 128)
    while w_bytes(tk, tn) > budget // 2 and tn > 256:
        tn = _balanced_tile(Na, max(256, _round_up(tn // 2, 128)), 128)
    while w_bytes(tk, tn) > budget // 2 and tk > 128:
        tk = _balanced_tile(Ka, max(128, _round_up(tk // 2, 128)), 128)
    while w_bytes(tk, tn) > budget // 2 and tn > 128:
        tn = _balanced_tile(Na, max(128, _round_up(tn // 2, 128)), 128)
    return tk, tn, _round_up(Ka, tk), _round_up(Na, tn)


def _choose_tm(M, tk, tn, x_dtype, out_dtype, budget):
    """Max tm (fewest weight re-streams) under what's left of the VMEM budget."""
    sub = _sublane(x_dtype)
    x_b = jnp.dtype(x_dtype).itemsize
    o_b = jnp.dtype(out_dtype).itemsize
    Ma = _round_up(M, sub)
    rem = budget - 2 * tk * tn * x_b          # weight double-buffer reserved
    # per output row: double-buffered (tm, tk) x tile + out block + f32 acc
    per_row = 2 * tk * x_b + 2 * tn * o_b + tn * 4
    cap = max(sub, (max(rem, 0) // per_row) // sub * sub)
    cap = min(cap, 1024)
    return _balanced_tile(Ma, cap, sub)


# ---------------------------------------------------------------------------
# kernels
# ---------------------------------------------------------------------------
def _mm_kernel_single(x_ref, w_ref, o_ref):
    """Single K tile: straight MXU matmul, no accumulator."""
    o_ref[...] = jnp.dot(
        x_ref[...], w_ref[...], preferred_element_type=jnp.float32
    ).astype(o_ref.dtype)


def _mm_kernel_oacc(x_ref, w_ref, o_ref):
    """f32 output: accumulate directly in the resident output block (no scratch)."""
    @pl.when(pl.program_id(2) == 0)
    def _():
        o_ref[...] = jnp.zeros_like(o_ref)

    o_ref[...] += jnp.dot(
        x_ref[...], w_ref[...], preferred_element_type=jnp.float32
    )


def _mm_kernel_acc(x_ref, w_ref, o_ref, acc_ref):
    """Non-f32 output: f32 scratch accumulator over the K grid axis."""
    @pl.when(pl.program_id(2) == 0)
    def _():
        acc_ref[...] = jnp.zeros_like(acc_ref)

    acc_ref[...] += jnp.dot(
        x_ref[...], w_ref[...], preferred_element_type=jnp.float32
    )

    @pl.when(pl.program_id(2) == pl.num_programs(2) - 1)
    def _():
        o_ref[...] = acc_ref[...].astype(o_ref.dtype)


# ---------------------------------------------------------------------------
# forward
# ---------------------------------------------------------------------------
@functools.partial(jax.jit, static_argnames=("out_dim", "tk", "tn"))
def _linear_head_padded(x, w_padded, *, out_dim, tk, tn):
    """y = x @ w for a weight already padded to tile-divisible (Kp, Np)."""
    *lead, K = x.shape
    Kp, Np = w_padded.shape
    if x.dtype != w_padded.dtype:
        raise ValueError("x / w dtype mismatch")
    if tk % 128 or tn % 128:
        raise ValueError("tk and tn must be multiples of 128")
    if Kp % tk or Np % tn or Kp < K or Np < out_dim:
        raise ValueError(
            "weight is not padded for (tk, tn); build params with "
            "prepare_linear_head_weight / init_linear_head_params")

    M = 1
    for d in lead:
        M *= d
    x2 = x.reshape(M, K)

    out_dtype = x.dtype
    x_b = jnp.dtype(x.dtype).itemsize
    o_b = jnp.dtype(out_dtype).itemsize
    out_is_f32 = jnp.dtype(out_dtype) == jnp.dtype(jnp.float32)

    budget, vmem_limit = _vmem_budget()
    tm = _choose_tm(M, tk, tn, x.dtype, out_dtype, budget)
    Mp = _round_up(M, tm)

    # Only x (the small array) is ever padded per call; zero K-tail is inert.
    if (Mp, Kp) != (M, K):
        x2 = jnp.pad(x2, ((0, Mp - M), (0, Kp - K)))

    ng, mg, kg = Np // tn, Mp // tm, Kp // tk

    cost = pl.CostEstimate(
        flops=2 * Mp * Np * Kp,
        transcendentals=0,
        bytes_accessed=(Mp * Kp * x_b * ng      # x re-read once per N tile
                        + Kp * Np * x_b * mg    # weight re-read once per M tile
                        + Mp * Np * o_b),
    )

    # Weight triple-buffering only if it fits comfortably and there are enough
    # grid steps for the extra depth to matter.
    base_usage = (2 * tm * tk * x_b + 2 * tk * tn * x_b
                  + 2 * tm * tn * o_b + tm * tn * 4)
    extra_wbuf = (base_usage + tk * tn * x_b <= budget) and (ng * mg * kg >= 4)

    # N grid axis FIRST: on v7x the two TensorCores shard output columns, so
    # each streams a disjoint half of the (K, N) weight.
    if kg == 1:
        kernel = _mm_kernel_single
        grid = (ng, mg)
        dims = ("parallel", "parallel")
        in_specs = [
            pl.BlockSpec((tm, Kp), lambda j, i: (i, 0)),
            _w_spec((Kp, tn), lambda j, i: (0, j), extra_wbuf),
        ]
        out_specs = pl.BlockSpec((tm, tn), lambda j, i: (i, j))
        scratch = []
    else:
        grid = (ng, mg, kg)
        dims = ("parallel", "parallel", "arbitrary")
        in_specs = [
            pl.BlockSpec((tm, tk), lambda j, i, k: (i, k)),
            _w_spec((tk, tn), lambda j, i, k: (k, j), extra_wbuf),
        ]
        out_specs = pl.BlockSpec((tm, tn), lambda j, i, k: (i, j))
        if out_is_f32:
            kernel = _mm_kernel_oacc       # accumulate in the output block
            scratch = []
        else:
            kernel = _mm_kernel_acc        # f32 scratch accumulator
            scratch = [pltpu.VMEM((tm, tn), jnp.float32)]

    yp = pl.pallas_call(
        kernel,
        out_shape=jax.ShapeDtypeStruct((Mp, Np), out_dtype),
        grid_spec=pltpu.PrefetchScalarGridSpec(
            num_scalar_prefetch=0,
            grid=grid,
            in_specs=in_specs,
            out_specs=out_specs,
            scratch_shapes=scratch,
        ),
        compiler_params=pltpu.CompilerParams(
            dimension_semantics=dims,
            vmem_limit_bytes=vmem_limit,
        ),
        cost_estimate=cost,
    )(x2, w_padded)

    y = yp if (Mp, Np) == (M, out_dim) else yp[:M, :out_dim]
    return y.reshape(*lead, out_dim)


def linear_head(x, params):
    """Forward of LinearHead: y = x @ W (no bias). x: (..., in_dim)."""
    if x.shape[-1] != params["in_dim"]:
        raise ValueError("in_dim mismatch")
    return _linear_head_padded(x, params["w"], out_dim=params["out_dim"],
                               tk=params["tk"], tn=params["tn"])


# ---------------------------------------------------------------------------
# init / weight preparation (done ONCE, outside the forward)
# ---------------------------------------------------------------------------
def prepare_linear_head_weight(w, *, tk=None, tn=None):
    """Pad the (in_dim, out_dim) weight once to a lane-aligned, tile-divisible
    (Kp, Np). The per-call forward then never copies the weight."""
    K, N = w.shape
    budget, _ = _vmem_budget()
    atk, atn, _, _ = _weight_tiles(K, N, w.dtype, budget)
    tk = atk if tk is None else int(tk)
    tn = atn if tn is None else int(tn)
    if tk % 128 or tn % 128:
        raise ValueError("tk and tn must be multiples of 128")
    Kp = _round_up(K, tk)
    Np = _round_up(N, tn)
    wp = w if (Kp, Np) == (K, N) else jnp.pad(w, ((0, Kp - K), (0, Np - N)))
    return {"w": wp, "in_dim": K, "out_dim": N, "tk": tk, "tn": tn}


def _trunc_normal(key, shape, std=0.02, a=-2.0, b=2.0, dtype=jnp.float32):
    """PyTorch trunc_normal_: a/b are ABSOLUTE cutoffs (not in units of std)."""
    u = jax.random.truncated_normal(
        key, lower=a / std, upper=b / std, shape=shape, dtype=jnp.float32)
    return (u * std).astype(dtype)


def init_linear_head_params(key, in_dim, out_dim, dtype=jnp.float32, *,
                            tk=None, tn=None):
    """trunc_normal(std=0.02) init mirroring the PyTorch module, stored as
    (in_dim, out_dim) — the transpose of PyTorch's (out, in) — and pre-padded."""
    w = _trunc_normal(key, (in_dim, out_dim), std=0.02, dtype=dtype)
    return prepare_linear_head_weight(w, tk=tk, tn=tn)


# ---------------------------------------------------------------------------
# demo / self-test
# ---------------------------------------------------------------------------
if __name__ == "__main__":
    key = jax.random.PRNGKey(0)
    k1, k2, k3, kx1, kx2, kx3 = jax.random.split(key, 6)

    # --- LinearHead(in_dim=32, out_dim=64), batch=8  (single-K-tile path)
    batch, in_dim, out_dim = 8, 32, 64
    params = init_linear_head_params(k1, in_dim, out_dim)
    x = jax.random.normal(kx1, (batch, in_dim), dtype=jnp.float32)
    y = jax.block_until_ready(linear_head(x, params))
    y_ref = x @ params["w"][:in_dim, :out_dim]
    assert y.shape == (batch, out_dim)
    assert jnp.allclose(y, y_ref, atol=1e-5, rtol=1e-5)

    # --- multi-K-tile path, f32 accumulates directly in the output block
    b2, k2d, n2 = 16, 384, 256
    params2 = init_linear_head_params(k2, k2d, n2, tk=128, tn=128)
    x2 = jax.random.normal(kx2, (b2, k2d), dtype=jnp.float32)
    y2 = jax.block_until_ready(linear_head(x2, params2))
    y2_ref = x2 @ params2["w"][:k2d, :n2]
    assert y2.shape == (b2, n2)
    assert jnp.allclose(y2, y2_ref, atol=1e-4, rtol=1e-3)

    # --- bf16 path: dtype-aware sublane (16) + f32 scratch accumulator
    b3, k3d, n3 = 4, 256, 128
    params3 = init_linear_head_params(k3, k3d, n3, dtype=jnp.bfloat16,
                                      tk=128, tn=128)
    x3 = jax.random.normal(kx3, (b3, k3d), dtype=jnp.bfloat16)
    y3 = jax.block_until_ready(linear_head(x3, params3))
    y3_ref = (x3.astype(jnp.float32)
              @ params3["w"][:k3d, :n3].astype(jnp.float32)).astype(jnp.bfloat16)
    assert y3.shape == (b3, n3)
    assert jnp.allclose(y3.astype(jnp.float32), y3_ref.astype(jnp.float32),
                        atol=2e-2, rtol=2e-2)

    print("KERNEL_OK")
</pallas_src>

<mosaic_0001>
module attributes {stable_mosaic.version = 11 : i64} {
  func.func @_mm_kernel_single(%arg0: i32, %arg1: i32, %arg2: memref<8x128xf32, #tpu.memory_space<vmem>>, %arg3: memref<128x128xf32, #tpu.memory_space<vmem>>, %arg4: memref<8x128xf32, #tpu.memory_space<vmem>>) attributes {dimension_semantics = [#tpu.dimension_semantics<parallel>, #tpu.dimension_semantics<parallel>], iteration_bounds = array<i64: 1, 1>, scalar_prefetch = 0 : i64, scratch_operands = 0 : i64, tpu.core_type = #tpu.core_type<tc>, window_params = [{transform_indices = @transform_0, window_bounds = array<i64: 8, 128>}, {transform_indices = @transform_1, window_bounds = array<i64: 128, 128>}, {transform_indices = @transform_2, window_bounds = array<i64: 8, 128>}]} {
    %c0 = arith.constant 0 : index
    %c0_0 = arith.constant 0 : index
    %0 = vector.load %arg2[%c0, %c0_0] : memref<8x128xf32, #tpu.memory_space<vmem>>, vector<8x128xf32>
    %c0_1 = arith.constant 0 : index
    %c0_2 = arith.constant 0 : index
    %1 = vector.load %arg3[%c0_1, %c0_2] : memref<128x128xf32, #tpu.memory_space<vmem>>, vector<128x128xf32>
    %cst = arith.constant dense<0.000000e+00> : vector<8x128xf32>
    %2 = tpu.matmul %0, %1, %cst {dimension_numbers = #tpu.dot_dimension_numbers<[1], [0], [0], [1], [0, 0, 1, 1], [], []>} : vector<8x128xf32>, vector<128x128xf32>, vector<8x128xf32> -> vector<8x128xf32>
    %c0_3 = arith.constant 0 : index
    %c0_4 = arith.constant 0 : index
    %3 = vector.load %arg4[%c0_3, %c0_4] : memref<8x128xf32, #tpu.memory_space<vmem>>, vector<8x128xf32>
    tpu.vector_store %arg4[%c0_3, %c0_4], %2 {strides = array<i32>} : memref<8x128xf32, #tpu.memory_space<vmem>>, vector<8x128xf32>,
    return
  }
  func.func @transform_0(%arg0: i32, %arg1: i32) -> (i32, i32) {
    %c0_i32 = arith.constant 0 : i32
    %c0_i32_0 = arith.constant 0 : i32
    return %arg1, %c0_i32 : i32, i32
  }
  func.func @transform_1(%arg0: i32, %arg1: i32) -> (i32, i32) {
    %c0_i32 = arith.constant 0 : i32
    %c0_i32_0 = arith.constant 0 : i32
    return %c0_i32, %arg0 : i32, i32
  }
  func.func @transform_2(%arg0: i32, %arg1: i32) -> (i32, i32) {
    %c0_i32 = arith.constant 0 : i32
    return %arg1, %arg0 : i32, i32
  }
}

</mosaic_0001>

<llo_original>
// kernel: _linear_head_padded.1
$region0: #{_linear_head_padded.1}
  #allocation0 [shape = 'u32[]', space=smem, size = 0x4, offset = 0x4, fixed_abs, tag = 'smem constant byte address 0x4 - core index']
  #allocation1 [shape = 'u32[144,128]{1,0:T(1,128)}', space=vmem, size = 0x12000, scoped, tag = 'internal scratch']
  %s0 = inlined_call_operand.vmem [shape: f32[8,128], index: 0, kind: input, shape index: {}]
  %s1 = inlined_call_operand.hbm [shape: f32[128,128], index: 1, kind: input, shape index: {}]
  %s2 = inlined_call_operand.hbm [shape: f32[8,128], index: 2, kind: output, shape index: {}]
  %s3 = sld [smem:[#allocation0]]
  $region22: #{_linear_head_padded.1} parent=0
    _
  %s5 = ssub.s32 1, %s3
  %s6 = scalar_select 0, %s5, %s3
  $region1: #{_linear_head_padded.1} parent=0
    #allocation2 [shape = 'u8[65536]{0}', space=vmem, size = 0x10000, scoped, tag = 'input window, operand 1, single buffered']
    #allocation3 [shape = 's32[1]{0}', space=sflag, size = 0x4, scoped, tag = 'scoped memory for _linear_head_padded.1']
    #allocation4 [shape = 's32[1]{0}', space=sflag, size = 0x4, scoped, tag = 'scoped memory for _linear_head_padded.1']
    #allocation5 [shape = 'u8[4096]{0}', space=vmem, size = 0x1000, scoped, tag = 'output window, operand 0, single buffered']
    %7 = vsyncpa [#allocation3], 0
    %8 = vsyncpa [#allocation4], 0
    // Predicated region
    $region2: #{_linear_head_padded.1} parent=1 // pred_check
      _
    $region3: #{_linear_head_padded.1} parent=1 // pred_check_branch
      %10 = sbr.rel (0) target = $region5
    $region4: #{_linear_head_padded.1} parent=1 // pred_region
      _
    $region5: #{_linear_head_padded.1} parent=1 // pred_fallthru
      _
    // Predicated region
    $region6: #{_linear_head_padded.1} parent=1 // pred_check
      _
    $region7: #{_linear_head_padded.1} parent=1 // pred_check_branch
      %12 = sbr.rel (0) target = $region9
    $region8: #{_linear_head_padded.1} parent=1 // pred_region
      %s14 = ssub.s32 2048, 2048
      %15 = vsyncadd [#allocation3], %s14
      %s16 = sshll.u32 [#allocation2], 4
      %s17 = int_to_ptr.vmem [resolvable:$true] %s16
      %22 = dma.hbm_to_vmem [thread:$0]  %s1, 2048, %s17, [#allocation3], 128, 128, 8
    $region9: #{_linear_head_padded.1} parent=1 // pred_fallthru
      _
    // Predicated region
    $region10: #{_linear_head_padded.1} parent=1 // pred_check
      _
    $region11: #{_linear_head_padded.1} parent=1 // pred_check_branch
      %24 = sbr.rel (0) target = $region13
    $region12: #{_linear_head_padded.1} parent=1 // pred_region
      %25 = dma.done [#allocation3], 2048
    $region13: #{_linear_head_padded.1} parent=1 // pred_fallthru
      _
    %v26 = vld [vmem:[%s0] sm:$0xff]
    %v27 = vld [vmem:[#allocation2] sm:$0xff]
    %v28 = vld [vmem:[#allocation2 + $0x8] sm:$0xff]
    %v29 = vld [vmem:[#allocation2 + $0x10] sm:$0xff]
    %v30 = vld [vmem:[#allocation2 + $0x18] sm:$0xff]
    %v31 = vld [vmem:[#allocation2 + $0x20] sm:$0xff]
    %v32 = vld [vmem:[#allocation2 + $0x28] sm:$0xff]
    %v33 = vld [vmem:[#allocation2 + $0x30] sm:$0xff]
    %v34 = vld [vmem:[#allocation2 + $0x38] sm:$0xff]
    %v35 = vld [vmem:[#allocation2 + $0x40] sm:$0xff]
    %v36 = vld [vmem:[#allocation2 + $0x48] sm:$0xff]
    %v37 = vld [vmem:[#allocation2 + $0x50] sm:$0xff]
    %v38 = vld [vmem:[#allocation2 + $0x58] sm:$0xff]
    %v39 = vld [vmem:[#allocation2 + $0x60] sm:$0xff]
    %v40 = vld [vmem:[#allocation2 + $0x68] sm:$0xff]
    %v41 = vld [vmem:[#allocation2 + $0x70] sm:$0xff]
    %v42 = vld [vmem:[#allocation2 + $0x78] sm:$0xff]
    %43 = vmatprep.subr.mxu0 0.0
    %44 = vmatpush1.msra.mxu0 %v27
    %45 = vmatprep.subr.mxu0 0.0
    %46 = vmatpush1.msra.mxu0 %v28
    %47 = vmatprep.subr.mxu0 0.0
    %48 = vmatpush1.msra.mxu0 %v29
    %49 = vmatprep.subr.mxu0 0.0
    %50 = vmatpush1.msra.mxu0 %v30
    %51 = vmatprep.subr.mxu0 0.0
    %52 = vmatpush1.msra.mxu0 %v31
    %53 = vmatprep.subr.mxu0 0.0
    %54 = vmatpush1.msra.mxu0 %v32
    %55 = vmatprep.subr.mxu0 0.0
    %56 = vmatpush1.msra.mxu0 %v33
    %57 = vmatprep.subr.mxu0 0.0
    %58 = vmatpush1.msra.mxu0 %v34
    %59 = vmatprep.subr.mxu0 0.0
    %60 = vmatpush1.msra.mxu0 %v35
    %61 = vmatprep.subr.mxu0 0.0
    %62 = vmatpush1.msra.mxu0 %v36
    %63 = vmatprep.subr.mxu0 0.0
    %64 = vmatpush1.msra.mxu0 %v37
    %65 = vmatprep.subr.mxu0 0.0
    %66 = vmatpush1.msra.mxu0 %v38
    %67 = vmatprep.subr.mxu0 0.0
    %68 = vmatpush1.msra.mxu0 %v39
    %69 = vmatprep.subr.mxu0 0.0
    %70 = vmatpush1.msra.mxu0 %v40
    %71 = vmatprep.subr.mxu0 0.0
    %72 = vmatpush1.msra.mxu0 %v41
    %73 = vmatprep.subr.mxu0 0.0
    %74 = vmatpush1.msra.mxu0 %v42
    %75 = vmatprep.subr.mxu0 0.0
    %76 = vmatpush1.msra.mxu0 0.0
    %77 = vmatprep.subr.mxu0 0.0
    %78 = vmatpush1.msra.mxu0 0.0
    %79 = vmatprep.subr.mxu0 0.0
    %80 = vmatpush1.msra.mxu0 0.0
    %81 = vmatprep.subr.mxu0 0.0
    %82 = vmatpush1.msra.mxu0 0.0
    %83 = vmatprep.subr.mxu0 0.0
    %84 = vmatpush1.msra.mxu0 0.0
    %85 = vmatprep.subr.mxu0 0.0
    %86 = vmatpush1.msra.mxu0 0.0
    %87 = vmatprep.subr.mxu0 0.0
    %88 = vmatpush1.msra.mxu0 0.0
    %89 = vmatprep.subr.mxu0 0.0
    %90 = vmatpush1.msra.mxu0 0.0
    %91 = vmatprep.subr.mxu0 0.0
    %92 = vmatpush1.msra.mxu0 0.0
    %93 = vmatprep.subr.mxu0 0.0
    %94 = vmatpush1.msra.mxu0 0.0
    %95 = vmatprep.subr.mxu0 0.0
    %96 = vmatpush1.msra.mxu0 0.0
    %97 = vmatprep.subr.mxu0 0.0
    %98 = vmatpush1.msra.mxu0 0.0
    %99 = vmatprep.subr.mxu0 0.0
    %100 = vmatpush1.msra.mxu0 0.0
    %101 = vmatprep.subr.mxu0 0.0
    %102 = vmatpush1.msra.mxu0 0.0
    %103 = vmatprep.subr.mxu0 0.0
    %104 = vmatpush1.msra.mxu0 0.0
    %105 = vmatprep.subr.mxu0 0.0
    %106 = vmatpush1.msra.mxu0 0.0
    %107 = vmatprep.mubr.f32.mxu0 0.0
    %108 = vmatmul.mubr.f32.gmra.mrb[0].mxu0 %v26
    %v109 = vpop.f32.mrb[0].mxu0
    %v110 = vadd.f32 0.0, %v109
    %v111 = vpop.f32.mrb[0].mxu0
    %112 = vdwg.mxu0
    %113 = vst [vmem:[#allocation5] sm:$0xff] %v110
    // Predicated region
    $region14: #{_linear_head_padded.1} parent=1 // pred_check
      _
    $region15: #{_linear_head_padded.1} parent=1 // pred_check_branch
      %115 = sbr.rel (0) target = $region17
    $region16: #{_linear_head_padded.1} parent=1 // pred_region
      %s117 = ssub.s32 128, 128
      %118 = vsyncadd [#allocation4], %s117
      %s120 = sshll.u32 [#allocation5], 4
      %s121 = int_to_ptr.vmem [resolvable:$true] %s120
      %123 = dma.vmem_to_hbm [thread:$0]  %s121, 128, %s2, [#allocation4]
    $region17: #{_linear_head_padded.1} parent=1 // pred_fallthru
      _
    // Predicated region
    $region18: #{_linear_head_padded.1} parent=1 // pred_check
      _
    $region19: #{_linear_head_padded.1} parent=1 // pred_check_branch
      %125 = sbr.rel (0) target = $region21
    $region20: #{_linear_head_padded.1} parent=1 // pred_region
      %126 = dma.done [#allocation4], 128
    $region21: #{_linear_head_padded.1} parent=1 // pred_fallthru
      _
    %127 = vsyncpa [#allocation3], 1
    %128 = vsyncpa [#allocation4], 1

</llo_original>
